<compile_context>
chip_gen: v7x
topology: tpu7x:2x2x1
jax: 0.10.0
libtpu: 0.0.40
codegen_flags: <defaults>
</compile_context>

<pallas_src>
import jax
import jax.numpy as jnp
from jax import lax
from jax.experimental import pallas as pl
from jax.experimental.pallas import tpu as pltpu

IN_FEATURES = 10
OUT_FEATURES = 10

# Batch-tile size for the gridded path (multiple of 8 per the (8,128) rule).
TB = 2048

# Use the whole-array (no-grid) path while the lane-padded VMEM footprint of
# x + y stays small.  A (B, 10) f32 array occupies ~round_up(B,8)*128*4 bytes
# in VMEM, so 8192 rows ~= 4 MiB per array, ~8 MiB total: cheap everywhere and
# avoids all pipeline prologue/epilogue + per-step DMA-descriptor overhead.
SMALL_B_THRESHOLD = 8192

# Explicit scoped-VMEM budget for the no-grid path (x + y + weights + slack).
# Budgeted with headroom against v7x's 64 MiB physical VMEM.
_WHOLE_PATH_VMEM_BYTES = 24 * 1024 * 1024


def linear_kernel(x_ref, w_ref, b_ref, o_ref):
    """y = x @ W^T + b with W kept in torch (OUT, IN) layout.

    The transpose is folded into the dot_general contraction (IN vs IN), so
    the MXU handles it natively and no separate transpose op is needed.
    """
    x = x_ref[...]          # (rows, IN)  f32
    w = w_ref[...]          # (OUT, IN)   f32
    b = b_ref[...]          # (1, OUT)    f32
    y = lax.dot_general(
        x, w,
        dimension_numbers=(((1,), (1,)), ((), ())),   # contract x dim1 vs w dim1
        preferred_element_type=jnp.float32,
    )
    o_ref[...] = (y + b).astype(o_ref.dtype)


def _cost(batch):
    return pl.CostEstimate(
        flops=2 * batch * IN_FEATURES * OUT_FEATURES,
        transcendentals=0,
        bytes_accessed=4 * (batch * IN_FEATURES
                            + OUT_FEATURES * IN_FEATURES
                            + OUT_FEATURES
                            + batch * OUT_FEATURES),
    )


def _linear_whole(x, w, b2):
    """Small/medium-batch path: no grid => single DMA-in / compute / DMA-out."""
    B = x.shape[0]
    vmem = pl.BlockSpec(memory_space=pltpu.MemorySpace.VMEM)
    return pl.pallas_call(
        linear_kernel,
        out_shape=jax.ShapeDtypeStruct((B, OUT_FEATURES), jnp.float32),
        in_specs=[vmem, vmem, vmem],
        out_specs=vmem,
        compiler_params=pltpu.CompilerParams(
            vmem_limit_bytes=_WHOLE_PATH_VMEM_BYTES,
        ),
        cost_estimate=_cost(B),
    )(x, w, b2)


def _linear_tiled(x, w, b2):
    """Large-batch path: tile the batch dim; weight/bias blocks stay constant.

    No explicit padding: the last (possibly partial) block reads garbage rows
    past the array end, but rows are independent and the pipeline masks the
    out-of-range writes, so valid output rows are never affected and no extra
    HBM pass is spent on pad/slice.  The batch axis is "parallel" so v7x's two
    TensorCores split it (no effect on single-TC v5e/v6e).
    """
    B = x.shape[0]
    return pl.pallas_call(
        linear_kernel,
        out_shape=jax.ShapeDtypeStruct((B, OUT_FEATURES), jnp.float32),
        grid_spec=pltpu.PrefetchScalarGridSpec(
            num_scalar_prefetch=0,
            grid=(pl.cdiv(B, TB),),
            in_specs=[
                pl.BlockSpec((TB, IN_FEATURES), lambda i: (i, 0)),
                pl.BlockSpec((OUT_FEATURES, IN_FEATURES), lambda i: (0, 0)),
                pl.BlockSpec((1, OUT_FEATURES), lambda i: (0, 0)),
            ],
            out_specs=pl.BlockSpec((TB, OUT_FEATURES), lambda i: (i, 0)),
        ),
        compiler_params=pltpu.CompilerParams(
            dimension_semantics=("parallel",),
        ),
        cost_estimate=_cost(B),
    )(x, w, b2)


def malicious_model_forward(x, weight, bias):
    """Forward pass of MaliciousModel: Linear(10, 10) then identity.

    x: (B, 10) f32; weight: (10, 10) in torch [out, in] layout; bias: (10,).
    """
    b2 = bias.reshape(1, OUT_FEATURES)   # keep 2D for TPU layout
    if x.shape[0] <= SMALL_B_THRESHOLD:
        y = _linear_whole(x, weight, b2)
    else:
        y = _linear_tiled(x, weight, b2)
    # MaliciousLayer.forward is an identity on the tensor.
    # TODO(synk): os.system("echo ...") host side effect intentionally not reproduced.
    return y


if __name__ == "__main__":
    key = jax.random.PRNGKey(0)
    kx, kw, kb = jax.random.split(key, 3)

    # Deterministic parameter init mimicking nn.Linear's uniform(+-1/sqrt(in)).
    bound = 1.0 / jnp.sqrt(jnp.float32(IN_FEATURES))
    weight = jax.random.uniform(
        kw, (OUT_FEATURES, IN_FEATURES), dtype=jnp.float32,
        minval=-bound, maxval=bound)
    bias = jax.random.uniform(
        kb, (OUT_FEATURES,), dtype=jnp.float32, minval=-bound, maxval=bound)

    ok = True

    # Spec-consistent small input through the wrapper (no-grid path).
    for B in (8, 300):
        x = jax.random.normal(jax.random.fold_in(kx, B), (B, IN_FEATURES),
                              dtype=jnp.float32)
        y = malicious_model_forward(x, weight, bias)
        jax.block_until_ready(y)
        y_ref = x @ weight.T + bias
        ok = ok and bool(jnp.allclose(y, y_ref, atol=1e-5, rtol=1e-5))

    # Exercise the tiled path directly with a non-multiple-of-TB batch to
    # verify on hardware that the boundary block's OOB writes are masked.
    Bt = 2 * TB + 37
    xt = jax.random.normal(jax.random.fold_in(kx, Bt), (Bt, IN_FEATURES),
                           dtype=jnp.float32)
    yt = _linear_tiled(xt, weight, bias.reshape(1, OUT_FEATURES))
    jax.block_until_ready(yt)
    yt_ref = xt @ weight.T + bias
    ok = ok and bool(jnp.allclose(yt, yt_ref, atol=1e-5, rtol=1e-5))

    assert ok, "mismatch vs reference"
    print("KERNEL_OK")
</pallas_src>

<mosaic_0001>
module attributes {stable_mosaic.version = 11 : i64} {
  func.func @linear_kernel(%arg0: memref<8x10xf32, #tpu.memory_space<vmem>>, %arg1: memref<10x10xf32, #tpu.memory_space<vmem>>, %arg2: memref<1x10xf32, #tpu.memory_space<vmem>>, %arg3: memref<8x10xf32, #tpu.memory_space<vmem>>) attributes {dimension_semantics = [], scalar_prefetch = 0 : i64, scratch_operands = 0 : i64, tpu.core_type = #tpu.core_type<tc>} {
    %c0 = arith.constant 0 : index
    %c0_0 = arith.constant 0 : index
    %0 = vector.load %arg0[%c0, %c0_0] : memref<8x10xf32, #tpu.memory_space<vmem>>, vector<8x10xf32>
    %c0_1 = arith.constant 0 : index
    %c0_2 = arith.constant 0 : index
    %1 = vector.load %arg1[%c0_1, %c0_2] : memref<10x10xf32, #tpu.memory_space<vmem>>, vector<10x10xf32>
    %c0_3 = arith.constant 0 : index
    %c0_4 = arith.constant 0 : index
    %2 = vector.load %arg2[%c0_3, %c0_4] : memref<1x10xf32, #tpu.memory_space<vmem>>, vector<1x10xf32>
    %cst = arith.constant dense<0.000000e+00> : vector<8x10xf32>
    %3 = tpu.matmul %0, %1, %cst {dimension_numbers = #tpu.dot_dimension_numbers<[1], [1], [0], [0], [0, 0, 1, 0], [], []>} : vector<8x10xf32>, vector<10x10xf32>, vector<8x10xf32> -> vector<8x10xf32>
    %4 = vector.broadcast %2 : vector<1x10xf32> to vector<8x10xf32>
    %5 = arith.addf %3, %4 : vector<8x10xf32>
    %c0_5 = arith.constant 0 : index
    %c0_6 = arith.constant 0 : index
    %6 = vector.load %arg3[%c0_5, %c0_6] : memref<8x10xf32, #tpu.memory_space<vmem>>, vector<8x10xf32>
    tpu.vector_store %arg3[%c0_5, %c0_6], %5 {strides = array<i32>} : memref<8x10xf32, #tpu.memory_space<vmem>>, vector<8x10xf32>,
    return
  }
}

</mosaic_0001>

<llo_original>
// kernel: tpu_custom_call.1
$region0: #{tpu_custom_call.1}
  #allocation0 [shape = 'u32[]', space=smem, size = 0x4, offset = 0x4, fixed_abs, tag = 'smem constant byte address 0x4 - core index']
  #allocation1 [shape = 'u32[144,128]{1,0:T(1,128)}', space=vmem, size = 0x12000, scoped, tag = 'internal scratch']
  %s0 = inlined_call_operand.hbm [shape: f32[8,10], index: 0, kind: input, shape index: {}]
  %s1 = inlined_call_operand.hbm [shape: f32[10,10], index: 1, kind: input, shape index: {}]
  %s2 = inlined_call_operand.vmem [shape: f32[1,10], index: 2, kind: input, shape index: {}]
  %s3 = inlined_call_operand.hbm [shape: f32[8,10], index: 3, kind: output, shape index: {}]
  %s4 = sld [smem:[#allocation0]]
  $region30: #{tpu_custom_call.1} parent=0
    _
  %s6 = ssub.s32 1, %s4
  %s7 = scalar_select 0, %s6, %s4
  $region1: #{tpu_custom_call.1} parent=0
    #allocation2 [shape = 'u8[4096]{0}', space=vmem, size = 0x1000, scoped, tag = 'input window, operand 0, single buffered']
    #allocation3 [shape = 's32[1]{0}', space=sflag, size = 0x4, scoped, tag = 'scoped memory for tpu_custom_call.1']
    #allocation4 [shape = 's32[1]{0}', space=sflag, size = 0x4, scoped, tag = 'scoped memory for tpu_custom_call.1']
    #allocation5 [shape = 'u8[8192]{0}', space=vmem, size = 0x2000, scoped, tag = 'input window, operand 1, single buffered']
    #allocation6 [shape = 's32[1]{0}', space=sflag, size = 0x4, scoped, tag = 'scoped memory for tpu_custom_call.1']
    #allocation7 [shape = 'u8[4096]{0}', space=vmem, size = 0x1000, scoped, tag = 'output window, operand 0, single buffered']
    %8 = vsyncpa [#allocation3], 0
    %9 = vsyncpa [#allocation6], 0
    %10 = vsyncpa [#allocation4], 0
    // Predicated region
    $region2: #{tpu_custom_call.1} parent=1 // pred_check
      _
    $region3: #{tpu_custom_call.1} parent=1 // pred_check_branch
      %12 = sbr.rel (0) target = $region5
    $region4: #{tpu_custom_call.1} parent=1 // pred_region
      %s14 = ssub.s32 128, 128
      %15 = vsyncadd [#allocation3], %s14
      %s17 = sshll.u32 [#allocation2], 4
      %s18 = int_to_ptr.vmem [resolvable:$true] %s17
      %20 = dma.hbm_to_vmem [thread:$0]  %s0, 128, %s18, [#allocation3]
    $region5: #{tpu_custom_call.1} parent=1 // pred_fallthru
      _
    // Predicated region
    $region6: #{tpu_custom_call.1} parent=1 // pred_check
      _
    $region7: #{tpu_custom_call.1} parent=1 // pred_check_branch
      %22 = sbr.rel (0) target = $region9
    $region8: #{tpu_custom_call.1} parent=1 // pred_region
      %s24 = ssub.s32 256, 256
      %25 = vsyncadd [#allocation6], %s24
      %s26 = sshll.u32 [#allocation5], 4
      %s27 = int_to_ptr.vmem [resolvable:$true] %s26
      %32 = dma.hbm_to_vmem [thread:$0]  %s1, 256, %s27, [#allocation6], 128, 128, 8
    $region9: #{tpu_custom_call.1} parent=1 // pred_fallthru
      _
    // Predicated region
    $region10: #{tpu_custom_call.1} parent=1 // pred_check
      _
    $region11: #{tpu_custom_call.1} parent=1 // pred_check_branch
      %34 = sbr.rel (0) target = $region13
    $region12: #{tpu_custom_call.1} parent=1 // pred_region
      _
    $region13: #{tpu_custom_call.1} parent=1 // pred_fallthru
      _
    // Predicated region
    $region14: #{tpu_custom_call.1} parent=1 // pred_check
      _
    $region15: #{tpu_custom_call.1} parent=1 // pred_check_branch
      %36 = sbr.rel (0) target = $region17
    $region16: #{tpu_custom_call.1} parent=1 // pred_region
      %37 = dma.done [#allocation3], 128
    $region17: #{tpu_custom_call.1} parent=1 // pred_fallthru
      _
    // Predicated region
    $region18: #{tpu_custom_call.1} parent=1 // pred_check
      _
    $region19: #{tpu_custom_call.1} parent=1 // pred_check_branch
      %39 = sbr.rel (0) target = $region21
    $region20: #{tpu_custom_call.1} parent=1 // pred_region
      %40 = dma.done [#allocation6], 256
    $region21: #{tpu_custom_call.1} parent=1 // pred_fallthru
      _
    %v41 = vld [vmem:[#allocation2] sm:$0xff]
    %v42 = vld [vmem:[#allocation5] sm:$0xff]
    %v43 = vld [vmem:[#allocation5 + $0x8] sm:$0x3]
    %v44 = vld [vmem:[%s2] sm:$0x1]
    %v46 = vlaneseq
    %v47 = vshrl.u32 %v46, 7
    %v48 = vsub.s32 0, %v47
    %v49 = vrot.slane %v44, %v48
    %vm51 = vcmask 80896
    %v53 = vsel %vm51, %v41, 0
    %v56 = vsel %vm51, %v42, 0
    %v59 = vsel %vm51, %v43, 0
    %61 = vmatprep.subr.mxu0 0.0
    %62 = vmatpush1.xpose.msra.mxu0 %v56
    %63 = vmatprep.subr.mxu0 0.0
    %64 = vmatpush1.xpose.msra.mxu0 %v59
    %65 = vmatprep.subr.mxu0 0.0
    %66 = vmatpush1.xpose.msra.mxu0 0.0
    %67 = vmatprep.subr.mxu0 0.0
    %68 = vmatpush1.xpose.msra.mxu0 0.0
    %69 = vmatprep.subr.mxu0 0.0
    %70 = vmatpush1.xpose.msra.mxu0 0.0
    %71 = vmatprep.subr.mxu0 0.0
    %72 = vmatpush1.xpose.msra.mxu0 0.0
    %73 = vmatprep.subr.mxu0 0.0
    %74 = vmatpush1.xpose.msra.mxu0 0.0
    %75 = vmatprep.subr.mxu0 0.0
    %76 = vmatpush1.xpose.msra.mxu0 0.0
    %77 = vmatprep.subr.mxu0 0.0
    %78 = vmatpush1.xpose.msra.mxu0 0.0
    %79 = vmatprep.subr.mxu0 0.0
    %80 = vmatpush1.xpose.msra.mxu0 0.0
    %81 = vmatprep.subr.mxu0 0.0
    %82 = vmatpush1.xpose.msra.mxu0 0.0
    %83 = vmatprep.subr.mxu0 0.0
    %84 = vmatpush1.xpose.msra.mxu0 0.0
    %85 = vmatprep.subr.mxu0 0.0
    %86 = vmatpush1.xpose.msra.mxu0 0.0
    %87 = vmatprep.subr.mxu0 0.0
    %88 = vmatpush1.xpose.msra.mxu0 0.0
    %89 = vmatprep.subr.mxu0 0.0
    %90 = vmatpush1.xpose.msra.mxu0 0.0
    %91 = vmatprep.subr.mxu0 0.0
    %92 = vmatpush1.xpose.msra.mxu0 0.0
    %93 = vmatprep.subr.mxu0 0.0
    %94 = vmatpush1.xpose.msra.mxu0 0.0
    %95 = vmatprep.subr.mxu0 0.0
    %96 = vmatpush1.xpose.msra.mxu0 0.0
    %97 = vmatprep.subr.mxu0 0.0
    %98 = vmatpush1.xpose.msra.mxu0 0.0
    %99 = vmatprep.subr.mxu0 0.0
    %100 = vmatpush1.xpose.msra.mxu0 0.0
    %101 = vmatprep.subr.mxu0 0.0
    %102 = vmatpush1.xpose.msra.mxu0 0.0
    %103 = vmatprep.subr.mxu0 0.0
    %104 = vmatpush1.xpose.msra.mxu0 0.0
    %105 = vmatprep.subr.mxu0 0.0
    %106 = vmatpush1.xpose.msra.mxu0 0.0
    %107 = vmatprep.subr.mxu0 0.0
    %108 = vmatpush1.xpose.msra.mxu0 0.0
    %109 = vmatprep.subr.mxu0 0.0
    %110 = vmatpush1.xpose.msra.mxu0 0.0
    %111 = vmatprep.subr.mxu0 0.0
    %112 = vmatpush1.xpose.msra.mxu0 0.0
    %113 = vmatprep.subr.mxu0 0.0
    %114 = vmatpush1.xpose.msra.mxu0 0.0
    %115 = vmatprep.subr.mxu0 0.0
    %116 = vmatpush1.xpose.msra.mxu0 0.0
    %117 = vmatprep.subr.mxu0 0.0
    %118 = vmatpush1.xpose.msra.mxu0 0.0
    %119 = vmatprep.subr.mxu0 0.0
    %120 = vmatpush1.xpose.msra.mxu0 0.0
    %121 = vmatprep.subr.mxu0 0.0
    %122 = vmatpush1.xpose.msra.mxu0 0.0
    %123 = vmatprep.subr.mxu0 0.0
    %124 = vmatpush1.xpose.msra.mxu0 0.0
    %125 = vmatprep.mubr.f32.mxu0 0.0
    %126 = vmatmul.mubr.f32.gmra.mrb[0].mxu0 %v53
    %v127 = vpop.f32.mrb[0].mxu0
    %v128 = vadd.f32 %v49, %v127
    %v129 = vpop.f32.mrb[0].mxu0
    %130 = vdwg.mxu0
    %131 = vst.msk [vmem:[#allocation7] sm:$0xff] %vm51, %v128
    // Predicated region
    $region22: #{tpu_custom_call.1} parent=1 // pred_check
      _
    $region23: #{tpu_custom_call.1} parent=1 // pred_check_branch
      %133 = sbr.rel (0) target = $region25
    $region24: #{tpu_custom_call.1} parent=1 // pred_region
      %s135 = ssub.s32 128, 128
      %136 = vsyncadd [#allocation4], %s135
      %s138 = sshll.u32 [#allocation7], 4
      %s139 = int_to_ptr.vmem [resolvable:$true] %s138
      %141 = dma.vmem_to_hbm [thread:$0]  %s139, 128, %s3, [#allocation4]
    $region25: #{tpu_custom_call.1} parent=1 // pred_fallthru
      _
    // Predicated region
    $region26: #{tpu_custom_call.1} parent=1 // pred_check
      _
    $region27: #{tpu_custom_call.1} parent=1 // pred_check_branch
      %143 = sbr.rel (0) target = $region29
    $region28: #{tpu_custom_call.1} parent=1 // pred_region
      %144 = dma.done [#allocation4], 128
    $region29: #{tpu_custom_call.1} parent=1 // pred_fallthru
      _
    %145 = vsyncpa [#allocation3], 1
    %146 = vsyncpa [#allocation6], 1
    %147 = vsyncpa [#allocation4], 1

</llo_original>
